<compile_context>
chip_gen: v7x
topology: tpu7x:2x2x1
jax: 0.10.0
libtpu: 0.0.40
codegen_flags: <defaults>
</compile_context>

<pallas_src>
import jax
import jax.numpy as jnp
import numpy as np
from jax.experimental import pallas as pl
from jax.experimental.pallas import tpu as pltpu  # noqa: F401  (TPU backend module)

# ----------------------------- model config ---------------------------------
INPUT_SIZES = [10, 8, 12]           # one per branch
HIDDEN_SIZES = [32, 24, 16]         # 3 hidden layers per branch (ReLU after each)
OUTPUT_SIZE = 6
NUM_BRANCHES = len(INPUT_SIZES)

ROWS = 8                                    # one sublane tile (the "vector" row)
KIN_P = 32                                  # sum(INPUT_SIZES)=30 -> pad to 32
H1_P = NUM_BRANCHES * HIDDEN_SIZES[0]       # 96  (3 x 32)
H2_P = NUM_BRANCHES * HIDDEN_SIZES[1]       # 72  (3 x 24)
H3_P = NUM_BRANCHES * HIDDEN_SIZES[2]       # 48  (3 x 16) = concat dim of final Linear
OUT_P = 128                                 # lane-dense output store (6 real lanes)


# ------------------------------ Pallas kernel -------------------------------
def multibranch_kernel(x_ref, w1_ref, b1_ref, w2_ref, b2_ref,
                       w3_ref, b3_ref, wf_ref, bf_ref, o_ref):
    # Fused block-diagonal matmul chain: one pass computes all three branches
    # and the final Linear.  Only row 0 of the (8, *) tiles is meaningful.
    x = x_ref[...]                                                    # (8, 32)
    h = jnp.maximum(
        jnp.dot(x, w1_ref[...], preferred_element_type=jnp.float32) + b1_ref[...], 0.0)
    h = jnp.maximum(
        jnp.dot(h, w2_ref[...], preferred_element_type=jnp.float32) + b2_ref[...], 0.0)
    h = jnp.maximum(
        jnp.dot(h, w3_ref[...], preferred_element_type=jnp.float32) + b3_ref[...], 0.0)
    # h row 0 == concat(branch_outputs); final Linear + bias, lane-dense store.
    o_ref[...] = (jnp.dot(h, wf_ref[...], preferred_element_type=jnp.float32)
                  + bf_ref[...]).astype(o_ref.dtype)


def multibranch_forward(xp, w1, b1, w2, b2, w3, b3, wf, bf):
    """All args are the packed (block-diagonal / lane-padded) tensors; f32."""
    out = pl.pallas_call(
        multibranch_kernel,
        out_shape=jax.ShapeDtypeStruct((ROWS, OUT_P), jnp.float32),
        # No grid / no BlockSpecs: every operand is tiny and mapped whole into
        # VMEM in a single kernel invocation (no pipeline, no per-step overhead).
    )(xp, w1, b1, w2, b2, w3, b3, wf, bf)
    # row 0, first OUTPUT_SIZE lanes = the real (squeezed) output vector
    return out[0, :OUTPUT_SIZE]


# --------------------------- parameter construction --------------------------
def init_linear(key, fan_in, fan_out):
    """PyTorch nn.Linear default init: U(-1/sqrt(fan_in), 1/sqrt(fan_in))."""
    kw, kb = jax.random.split(key)
    bound = 1.0 / np.sqrt(fan_in)
    w = jax.random.uniform(kw, (fan_in, fan_out), jnp.float32, -bound, bound)
    b = jax.random.uniform(kb, (fan_out,), jnp.float32, -bound, bound)
    return w, b


def block_diag_pack(blocks, rows_p, cols_p):
    """Place each (r_i, c_i) block on the diagonal of a zero (rows_p, cols_p) matrix."""
    out = jnp.zeros((rows_p, cols_p), jnp.float32)
    r = c = 0
    for m in blocks:
        out = out.at[r:r + m.shape[0], c:c + m.shape[1]].set(m)
        r += m.shape[0]
        c += m.shape[1]
    return out


def concat_pack_row(vecs, n_p):
    """Concatenate 1-D vectors into lane range [0, sum) of a (1, n_p) row."""
    v = jnp.concatenate(vecs, axis=0)
    return jnp.zeros((1, n_p), jnp.float32).at[0, :v.shape[0]].set(v)


if __name__ == "__main__":
    key = jax.random.PRNGKey(0)

    # -------- build deterministic parameters (logical, unpadded) --------
    branch_params = []   # list of [(w,b), (w,b), (w,b)] per branch, w stored (in, out)
    for bi in range(NUM_BRANCHES):
        layers = []
        prev = INPUT_SIZES[bi]
        for h in HIDDEN_SIZES:
            key, sub = jax.random.split(key)
            layers.append(init_linear(sub, prev, h))
            prev = h
        branch_params.append(layers)
    key, sub = jax.random.split(key)
    wf_full, bf_full = init_linear(sub, NUM_BRANCHES * HIDDEN_SIZES[2], OUTPUT_SIZE)

    # -------- deterministic example inputs (one 1-D vector per branch) --------
    inputs = []
    for bi, sz in enumerate(INPUT_SIZES):
        key, sub = jax.random.split(key)
        inputs.append(jax.random.normal(sub, (sz,), jnp.float32))

    # -------- pure-JAX reference (mirrors the PyTorch forward) --------
    branch_outs = []
    for bi in range(NUM_BRANCHES):
        h = inputs[bi]
        for (w, b) in branch_params[bi]:
            h = jnp.maximum(h @ w + b, 0.0)
        branch_outs.append(h)
    combined = jnp.concatenate(branch_outs, axis=0)
    ref = combined @ wf_full + bf_full            # shape (OUTPUT_SIZE,)

    # -------- pack fused block-diagonal tensors for the kernel --------
    # input: all branch inputs in distinct lane ranges of one (8, KIN_P) tile
    xp = jnp.zeros((ROWS, KIN_P), jnp.float32)
    off = 0
    for bi, sz in enumerate(INPUT_SIZES):
        xp = xp.at[0, off:off + sz].set(inputs[bi])
        off += sz

    w1 = block_diag_pack([branch_params[bi][0][0] for bi in range(NUM_BRANCHES)],
                         KIN_P, H1_P)                                 # (32, 96)
    b1 = concat_pack_row([branch_params[bi][0][1] for bi in range(NUM_BRANCHES)], H1_P)
    w2 = block_diag_pack([branch_params[bi][1][0] for bi in range(NUM_BRANCHES)],
                         H1_P, H2_P)                                  # (96, 72)
    b2 = concat_pack_row([branch_params[bi][1][1] for bi in range(NUM_BRANCHES)], H2_P)
    w3 = block_diag_pack([branch_params[bi][2][0] for bi in range(NUM_BRANCHES)],
                         H2_P, H3_P)                                  # (72, 48)
    b3 = concat_pack_row([branch_params[bi][2][1] for bi in range(NUM_BRANCHES)], H3_P)

    # final Linear: rows already in concat order (branch0, branch1, branch2)
    wf = jnp.zeros((H3_P, OUT_P), jnp.float32).at[:, :OUTPUT_SIZE].set(wf_full)
    bf = jnp.zeros((1, OUT_P), jnp.float32).at[0, :OUTPUT_SIZE].set(bf_full)

    # -------- run the Pallas kernel --------
    out = multibranch_forward(xp, w1, b1, w2, b2, w3, b3, wf, bf)
    out = jax.block_until_ready(out)

    np.testing.assert_allclose(np.asarray(out), np.asarray(ref), rtol=1e-5, atol=1e-5)
    print("KERNEL_OK")
</pallas_src>

<mosaic_0001>
module attributes {stable_mosaic.version = 11 : i64} {
  func.func @multibranch_kernel(%arg0: memref<8x32xf32, #tpu.memory_space<vmem>>, %arg1: memref<32x96xf32, #tpu.memory_space<vmem>>, %arg2: memref<1x96xf32, #tpu.memory_space<vmem>>, %arg3: memref<96x72xf32, #tpu.memory_space<vmem>>, %arg4: memref<1x72xf32, #tpu.memory_space<vmem>>, %arg5: memref<72x48xf32, #tpu.memory_space<vmem>>, %arg6: memref<1x48xf32, #tpu.memory_space<vmem>>, %arg7: memref<48x128xf32, #tpu.memory_space<vmem>>, %arg8: memref<1x128xf32, #tpu.memory_space<vmem>>, %arg9: memref<8x128xf32, #tpu.memory_space<vmem>>) attributes {dimension_semantics = [], scalar_prefetch = 0 : i64, scratch_operands = 0 : i64, tpu.core_type = #tpu.core_type<tc>} {
    %c0 = arith.constant 0 : index
    %c0_0 = arith.constant 0 : index
    %0 = vector.load %arg0[%c0, %c0_0] : memref<8x32xf32, #tpu.memory_space<vmem>>, vector<8x32xf32>
    %c0_1 = arith.constant 0 : index
    %c0_2 = arith.constant 0 : index
    %1 = vector.load %arg1[%c0_1, %c0_2] : memref<32x96xf32, #tpu.memory_space<vmem>>, vector<32x96xf32>
    %cst = arith.constant dense<0.000000e+00> : vector<8x96xf32>
    %2 = tpu.matmul %0, %1, %cst {dimension_numbers = #tpu.dot_dimension_numbers<[1], [0], [0], [1], [0, 0, 1, 1], [], []>} : vector<8x32xf32>, vector<32x96xf32>, vector<8x96xf32> -> vector<8x96xf32>
    %c0_3 = arith.constant 0 : index
    %c0_4 = arith.constant 0 : index
    %3 = vector.load %arg2[%c0_3, %c0_4] : memref<1x96xf32, #tpu.memory_space<vmem>>, vector<1x96xf32>
    %4 = vector.broadcast %3 : vector<1x96xf32> to vector<8x96xf32>
    %5 = arith.addf %2, %4 : vector<8x96xf32>
    %cst_5 = arith.constant 0.000000e+00 : f32
    %6 = vector.broadcast %cst_5 : f32 to vector<8x96xf32>
    %7 = arith.maximumf %5, %6 : vector<8x96xf32>
    %c0_6 = arith.constant 0 : index
    %c0_7 = arith.constant 0 : index
    %8 = vector.load %arg3[%c0_6, %c0_7] : memref<96x72xf32, #tpu.memory_space<vmem>>, vector<96x72xf32>
    %cst_8 = arith.constant dense<0.000000e+00> : vector<8x72xf32>
    %9 = tpu.matmul %7, %8, %cst_8 {dimension_numbers = #tpu.dot_dimension_numbers<[1], [0], [0], [1], [0, 0, 1, 1], [], []>} : vector<8x96xf32>, vector<96x72xf32>, vector<8x72xf32> -> vector<8x72xf32>
    %c0_9 = arith.constant 0 : index
    %c0_10 = arith.constant 0 : index
    %10 = vector.load %arg4[%c0_9, %c0_10] : memref<1x72xf32, #tpu.memory_space<vmem>>, vector<1x72xf32>
    %11 = vector.broadcast %10 : vector<1x72xf32> to vector<8x72xf32>
    %12 = arith.addf %9, %11 : vector<8x72xf32>
    %cst_11 = arith.constant 0.000000e+00 : f32
    %13 = vector.broadcast %cst_11 : f32 to vector<8x72xf32>
    %14 = arith.maximumf %12, %13 : vector<8x72xf32>
    %c0_12 = arith.constant 0 : index
    %c0_13 = arith.constant 0 : index
    %15 = vector.load %arg5[%c0_12, %c0_13] : memref<72x48xf32, #tpu.memory_space<vmem>>, vector<72x48xf32>
    %cst_14 = arith.constant dense<0.000000e+00> : vector<8x48xf32>
    %16 = tpu.matmul %14, %15, %cst_14 {dimension_numbers = #tpu.dot_dimension_numbers<[1], [0], [0], [1], [0, 0, 1, 1], [], []>} : vector<8x72xf32>, vector<72x48xf32>, vector<8x48xf32> -> vector<8x48xf32>
    %c0_15 = arith.constant 0 : index
    %c0_16 = arith.constant 0 : index
    %17 = vector.load %arg6[%c0_15, %c0_16] : memref<1x48xf32, #tpu.memory_space<vmem>>, vector<1x48xf32>
    %18 = vector.broadcast %17 : vector<1x48xf32> to vector<8x48xf32>
    %19 = arith.addf %16, %18 : vector<8x48xf32>
    %cst_17 = arith.constant 0.000000e+00 : f32
    %20 = vector.broadcast %cst_17 : f32 to vector<8x48xf32>
    %21 = arith.maximumf %19, %20 : vector<8x48xf32>
    %c0_18 = arith.constant 0 : index
    %c0_19 = arith.constant 0 : index
    %22 = vector.load %arg7[%c0_18, %c0_19] : memref<48x128xf32, #tpu.memory_space<vmem>>, vector<48x128xf32>
    %cst_20 = arith.constant dense<0.000000e+00> : vector<8x128xf32>
    %23 = tpu.matmul %21, %22, %cst_20 {dimension_numbers = #tpu.dot_dimension_numbers<[1], [0], [0], [1], [0, 0, 1, 1], [], []>} : vector<8x48xf32>, vector<48x128xf32>, vector<8x128xf32> -> vector<8x128xf32>
    %c0_21 = arith.constant 0 : index
    %c0_22 = arith.constant 0 : index
    %24 = vector.load %arg8[%c0_21, %c0_22] : memref<1x128xf32, #tpu.memory_space<vmem>>, vector<1x128xf32>
    %25 = vector.broadcast %24 : vector<1x128xf32> to vector<8x128xf32>
    %26 = arith.addf %23, %25 : vector<8x128xf32>
    %c0_23 = arith.constant 0 : index
    %c0_24 = arith.constant 0 : index
    %27 = vector.load %arg9[%c0_23, %c0_24] : memref<8x128xf32, #tpu.memory_space<vmem>>, vector<8x128xf32>
    tpu.vector_store %arg9[%c0_23, %c0_24], %26 {strides = array<i32>} : memref<8x128xf32, #tpu.memory_space<vmem>>, vector<8x128xf32>,
    return
  }
}

</mosaic_0001>

<llo_original>
// kernel: tpu_custom_call.1
$region0: #{tpu_custom_call.1}
  #allocation0 [shape = 'u32[]', space=smem, size = 0x4, offset = 0x4, fixed_abs, tag = 'smem constant byte address 0x4 - core index']
  #allocation1 [shape = 'u32[144,128]{1,0:T(1,128)}', space=vmem, size = 0x12000, scoped, tag = 'internal scratch']
  %s0 = inlined_call_operand.vmem [shape: f32[8,32], index: 0, kind: input, shape index: {}]
  %s1 = inlined_call_operand.vmem [shape: f32[32,96], index: 1, kind: input, shape index: {}]
  %s2 = inlined_call_operand.vmem [shape: f32[1,96], index: 2, kind: input, shape index: {}]
  %s3 = inlined_call_operand.vmem [shape: f32[96,72], index: 3, kind: input, shape index: {}]
  %s4 = inlined_call_operand.vmem [shape: f32[1,72], index: 4, kind: input, shape index: {}]
  %s5 = inlined_call_operand.vmem [shape: f32[72,48], index: 5, kind: input, shape index: {}]
  %s6 = inlined_call_operand.vmem [shape: f32[1,48], index: 6, kind: input, shape index: {}]
  %s7 = inlined_call_operand.vmem [shape: f32[48,128], index: 7, kind: input, shape index: {}]
  %s8 = inlined_call_operand.vmem [shape: f32[1,128], index: 8, kind: input, shape index: {}]
  %s9 = inlined_call_operand.hbm [shape: f32[8,128], index: 9, kind: output, shape index: {}]
  %s10 = sld [smem:[#allocation0]]
  $region46: #{tpu_custom_call.1} parent=0
    _
  %s12 = ssub.s32 1, %s10
  %s13 = scalar_select 0, %s12, %s10
  $region1: #{tpu_custom_call.1} parent=0
    #allocation2 [shape = 'u8[4096]{0}', space=vmem, size = 0x1000, scoped, tag = 'output window, operand 0, single buffered']
    #allocation3 [shape = 's32[1]{0}', space=sflag, size = 0x4, scoped, tag = 'scoped memory for tpu_custom_call.1']
    %14 = vsyncpa [#allocation3], 0
    // Predicated region
    $region2: #{tpu_custom_call.1} parent=1 // pred_check
      _
    $region3: #{tpu_custom_call.1} parent=1 // pred_check_branch
      %16 = sbr.rel (0) target = $region5
    $region4: #{tpu_custom_call.1} parent=1 // pred_region
      _
    $region5: #{tpu_custom_call.1} parent=1 // pred_fallthru
      _
    // Predicated region
    $region6: #{tpu_custom_call.1} parent=1 // pred_check
      _
    $region7: #{tpu_custom_call.1} parent=1 // pred_check_branch
      %18 = sbr.rel (0) target = $region9
    $region8: #{tpu_custom_call.1} parent=1 // pred_region
      _
    $region9: #{tpu_custom_call.1} parent=1 // pred_fallthru
      _
    // Predicated region
    $region10: #{tpu_custom_call.1} parent=1 // pred_check
      _
    $region11: #{tpu_custom_call.1} parent=1 // pred_check_branch
      %20 = sbr.rel (0) target = $region13
    $region12: #{tpu_custom_call.1} parent=1 // pred_region
      _
    $region13: #{tpu_custom_call.1} parent=1 // pred_fallthru
      _
    // Predicated region
    $region14: #{tpu_custom_call.1} parent=1 // pred_check
      _
    $region15: #{tpu_custom_call.1} parent=1 // pred_check_branch
      %22 = sbr.rel (0) target = $region17
    $region16: #{tpu_custom_call.1} parent=1 // pred_region
      _
    $region17: #{tpu_custom_call.1} parent=1 // pred_fallthru
      _
    // Predicated region
    $region18: #{tpu_custom_call.1} parent=1 // pred_check
      _
    $region19: #{tpu_custom_call.1} parent=1 // pred_check_branch
      %24 = sbr.rel (0) target = $region21
    $region20: #{tpu_custom_call.1} parent=1 // pred_region
      _
    $region21: #{tpu_custom_call.1} parent=1 // pred_fallthru
      _
    // Predicated region
    $region22: #{tpu_custom_call.1} parent=1 // pred_check
      _
    $region23: #{tpu_custom_call.1} parent=1 // pred_check_branch
      %26 = sbr.rel (0) target = $region25
    $region24: #{tpu_custom_call.1} parent=1 // pred_region
      _
    $region25: #{tpu_custom_call.1} parent=1 // pred_fallthru
      _
    // Predicated region
    $region26: #{tpu_custom_call.1} parent=1 // pred_check
      _
    $region27: #{tpu_custom_call.1} parent=1 // pred_check_branch
      %28 = sbr.rel (0) target = $region29
    $region28: #{tpu_custom_call.1} parent=1 // pred_region
      _
    $region29: #{tpu_custom_call.1} parent=1 // pred_fallthru
      _
    // Predicated region
    $region30: #{tpu_custom_call.1} parent=1 // pred_check
      _
    $region31: #{tpu_custom_call.1} parent=1 // pred_check_branch
      %30 = sbr.rel (0) target = $region33
    $region32: #{tpu_custom_call.1} parent=1 // pred_region
      _
    $region33: #{tpu_custom_call.1} parent=1 // pred_fallthru
      _
    // Predicated region
    $region34: #{tpu_custom_call.1} parent=1 // pred_check
      _
    $region35: #{tpu_custom_call.1} parent=1 // pred_check_branch
      %32 = sbr.rel (0) target = $region37
    $region36: #{tpu_custom_call.1} parent=1 // pred_region
      _
    $region37: #{tpu_custom_call.1} parent=1 // pred_fallthru
      _
    %v33 = vld [vmem:[%s0] sm:$0xff]
    %v34 = vld [vmem:[%s1] sm:$0xff]
    %v35 = vld [vmem:[%s1 + $0x8] sm:$0xff]
    %v36 = vld [vmem:[%s1 + $0x10] sm:$0xff]
    %v37 = vld [vmem:[%s1 + $0x18] sm:$0xff]
    %v38 = vld [vmem:[%s2] sm:$0x1]
    %v40 = vlaneseq
    %v41 = vshrl.u32 %v40, 7
    %v42 = vsub.s32 0, %v41
    %v43 = vrot.slane %v38, %v42
    %vm45 = vcmask 261120
    %v47 = vsel %vm45, %v33, 0
    %49 = vmatprep.subr.mxu0 0.0
    %50 = vmatpush1.msra.mxu0 %v34
    %51 = vmatprep.subr.mxu0 0.0
    %52 = vmatpush1.msra.mxu0 %v35
    %53 = vmatprep.subr.mxu0 0.0
    %54 = vmatpush1.msra.mxu0 %v36
    %55 = vmatprep.subr.mxu0 0.0
    %56 = vmatpush1.msra.mxu0 %v37
    %57 = vmatprep.subr.mxu0 0.0
    %58 = vmatpush1.msra.mxu0 0.0
    %59 = vmatprep.subr.mxu0 0.0
    %60 = vmatpush1.msra.mxu0 0.0
    %61 = vmatprep.subr.mxu0 0.0
    %62 = vmatpush1.msra.mxu0 0.0
    %63 = vmatprep.subr.mxu0 0.0
    %64 = vmatpush1.msra.mxu0 0.0
    %65 = vmatprep.subr.mxu0 0.0
    %66 = vmatpush1.msra.mxu0 0.0
    %67 = vmatprep.subr.mxu0 0.0
    %68 = vmatpush1.msra.mxu0 0.0
    %69 = vmatprep.subr.mxu0 0.0
    %70 = vmatpush1.msra.mxu0 0.0
    %71 = vmatprep.subr.mxu0 0.0
    %72 = vmatpush1.msra.mxu0 0.0
    %73 = vmatprep.subr.mxu0 0.0
    %74 = vmatpush1.msra.mxu0 0.0
    %75 = vmatprep.subr.mxu0 0.0
    %76 = vmatpush1.msra.mxu0 0.0
    %77 = vmatprep.subr.mxu0 0.0
    %78 = vmatpush1.msra.mxu0 0.0
    %79 = vmatprep.subr.mxu0 0.0
    %80 = vmatpush1.msra.mxu0 0.0
    %81 = vmatprep.subr.mxu0 0.0
    %82 = vmatpush1.msra.mxu0 0.0
    %83 = vmatprep.subr.mxu0 0.0
    %84 = vmatpush1.msra.mxu0 0.0
    %85 = vmatprep.subr.mxu0 0.0
    %86 = vmatpush1.msra.mxu0 0.0
    %87 = vmatprep.subr.mxu0 0.0
    %88 = vmatpush1.msra.mxu0 0.0
    %89 = vmatprep.subr.mxu0 0.0
    %90 = vmatpush1.msra.mxu0 0.0
    %91 = vmatprep.subr.mxu0 0.0
    %92 = vmatpush1.msra.mxu0 0.0
    %93 = vmatprep.subr.mxu0 0.0
    %94 = vmatpush1.msra.mxu0 0.0
    %95 = vmatprep.subr.mxu0 0.0
    %96 = vmatpush1.msra.mxu0 0.0
    %97 = vmatprep.subr.mxu0 0.0
    %98 = vmatpush1.msra.mxu0 0.0
    %99 = vmatprep.subr.mxu0 0.0
    %100 = vmatpush1.msra.mxu0 0.0
    %101 = vmatprep.subr.mxu0 0.0
    %102 = vmatpush1.msra.mxu0 0.0
    %103 = vmatprep.subr.mxu0 0.0
    %104 = vmatpush1.msra.mxu0 0.0
    %105 = vmatprep.subr.mxu0 0.0
    %106 = vmatpush1.msra.mxu0 0.0
    %107 = vmatprep.subr.mxu0 0.0
    %108 = vmatpush1.msra.mxu0 0.0
    %109 = vmatprep.subr.mxu0 0.0
    %110 = vmatpush1.msra.mxu0 0.0
    %111 = vmatprep.subr.mxu0 0.0
    %112 = vmatpush1.msra.mxu0 0.0
    %113 = vmatprep.mubr.f32.mxu0 0.0
    %114 = vmatmul.mubr.f32.gmra.mrb[0].mxu0 %v47
    %v115 = vpop.f32.mrb[0].mxu0
    %v116 = vadd.f32 %v43, %v115
    %v117 = vpop.f32.mrb[0].mxu0
    %118 = vdwg.mxu0
    %v119 = vmax.f32 %v116, 0.0
    %v120 = vld [vmem:[%s3] sm:$0xff]
    %v121 = vld [vmem:[%s3 + $0x8] sm:$0xff]
    %v122 = vld [vmem:[%s3 + $0x10] sm:$0xff]
    %v123 = vld [vmem:[%s3 + $0x18] sm:$0xff]
    %v124 = vld [vmem:[%s3 + $0x20] sm:$0xff]
    %v125 = vld [vmem:[%s3 + $0x28] sm:$0xff]
    %v126 = vld [vmem:[%s3 + $0x30] sm:$0xff]
    %v127 = vld [vmem:[%s3 + $0x38] sm:$0xff]
    %v128 = vld [vmem:[%s3 + $0x40] sm:$0xff]
    %v129 = vld [vmem:[%s3 + $0x48] sm:$0xff]
    %v130 = vld [vmem:[%s3 + $0x50] sm:$0xff]
    %v131 = vld [vmem:[%s3 + $0x58] sm:$0xff]
    %v132 = vld [vmem:[%s4] sm:$0x1]
    %v134 = vlaneseq
    %v135 = vshrl.u32 %v134, 7
    %v136 = vsub.s32 0, %v135
    %v137 = vrot.slane %v132, %v136
    %vm139 = vcmask 785408
    %v141 = vsel %vm139, %v119, 0
    %143 = vmatprep.subr.mxu0 0.0
    %144 = vmatpush1.msra.mxu0 %v120
    %145 = vmatprep.subr.mxu0 0.0
    %146 = vmatpush1.msra.mxu0 %v121
    %147 = vmatprep.subr.mxu0 0.0
    %148 = vmatpush1.msra.mxu0 %v122
    %149 = vmatprep.subr.mxu0 0.0
    %150 = vmatpush1.msra.mxu0 %v123
    %151 = vmatprep.subr.mxu0 0.0
    %152 = vmatpush1.msra.mxu0 %v124
    %153 = vmatprep.subr.mxu0 0.0
    %154 = vmatpush1.msra.mxu0 %v125
    %155 = vmatprep.subr.mxu0 0.0
    %156 = vmatpush1.msra.mxu0 %v126
    %157 = vmatprep.subr.mxu0 0.0
    %158 = vmatpush1.msra.mxu0 %v127
    %159 = vmatprep.subr.mxu0 0.0
    %160 = vmatpush1.msra.mxu0 %v128
    %161 = vmatprep.subr.mxu0 0.0
    %162 = vmatpush1.msra.mxu0 %v129
    %163 = vmatprep.subr.mxu0 0.0
    %164 = vmatpush1.msra.mxu0 %v130
    %165 = vmatprep.subr.mxu0 0.0
    %166 = vmatpush1.msra.mxu0 %v131
    %167 = vmatprep.subr.mxu0 0.0
    %168 = vmatpush1.msra.mxu0 0.0
    %169 = vmatprep.subr.mxu0 0.0
    %170 = vmatpush1.msra.mxu0 0.0
    %171 = vmatprep.subr.mxu0 0.0
    %172 = vmatpush1.msra.mxu0 0.0
    %173 = vmatprep.subr.mxu0 0.0
    %174 = vmatpush1.msra.mxu0 0.0
    %175 = vmatprep.subr.mxu0 0.0
    %176 = vmatpush1.msra.mxu0 0.0
    %177 = vmatprep.subr.mxu0 0.0
    %178 = vmatpush1.msra.mxu0 0.0
    %179 = vmatprep.subr.mxu0 0.0
    %180 = vmatpush1.msra.mxu0 0.0
    %181 = vmatprep.subr.mxu0 0.0
    %182 = vmatpush1.msra.mxu0 0.0
    %183 = vmatprep.subr.mxu0 0.0
    %184 = vmatpush1.msra.mxu0 0.0
    %185 = vmatprep.subr.mxu0 0.0
    %186 = vmatpush1.msra.mxu0 0.0
    %187 = vmatprep.subr.mxu0 0.0
    %188 = vmatpush1.msra.mxu0 0.0
    %189 = vmatprep.subr.mxu0 0.0
    %190 = vmatpush1.msra.mxu0 0.0
    %191 = vmatprep.subr.mxu0 0.0
    %192 = vmatpush1.msra.mxu0 0.0
    %193 = vmatprep.subr.mxu0 0.0
    %194 = vmatpush1.msra.mxu0 0.0
    %195 = vmatprep.subr.mxu0 0.0
    %196 = vmatpush1.msra.mxu0 0.0
    %197 = vmatprep.subr.mxu0 0.0
    %198 = vmatpush1.msra.mxu0 0.0
    %199 = vmatprep.subr.mxu0 0.0
    %200 = vmatpush1.msra.mxu0 0.0
    %201 = vmatprep.subr.mxu0 0.0
    %202 = vmatpush1.msra.mxu0 0.0
    %203 = vmatprep.subr.mxu0 0.0
    %204 = vmatpush1.msra.mxu0 0.0
    %205 = vmatprep.subr.mxu0 0.0
    %206 = vmatpush1.msra.mxu0 0.0
    %207 = vmatprep.mubr.f32.mxu0 0.0
    %208 = vmatmul.mubr.f32.gmra.mrb[0].mxu0 %v141
    %v209 = vpop.f32.mrb[0].mxu0
    %v210 = vadd.f32 %v137, %v209
    %v211 = vpop.f32.mrb[0].mxu0
    %212 = vdwg.mxu0
    %v213 = vmax.f32 %v210, 0.0
    %v214 = vld [vmem:[%s5] sm:$0xff]
    %v215 = vld [vmem:[%s5 + $0x8] sm:$0xff]
    %v216 = vld [vmem:[%s5 + $0x10] sm:$0xff]
    %v217 = vld [vmem:[%s5 + $0x18] sm:$0xff]
    %v218 = vld [vmem:[%s5 + $0x20] sm:$0xff]
    %v219 = vld [vmem:[%s5 + $0x28] sm:$0xff]
    %v220 = vld [vmem:[%s5 + $0x30] sm:$0xff]
    %v221 = vld [vmem:[%s5 + $0x38] sm:$0xff]
    %v222 = vld [vmem:[%s5 + $0x40] sm:$0xff]
    %v223 = vld [vmem:[%s6] sm:$0x1]
    %v225 = vlaneseq
    %v226 = vshrl.u32 %v225, 7
    %v227 = vsub.s32 0, %v226
    %v228 = vrot.slane %v223, %v227
    %vm230 = vcmask 588800
    %v232 = vsel %vm230, %v213, 0
    %234 = vmatprep.subr.mxu0 0.0
    %235 = vmatpush1.msra.mxu0 %v214
    %236 = vmatprep.subr.mxu0 0.0
    %237 = vmatpush1.msra.mxu0 %v215
    %238 = vmatprep.subr.mxu0 0.0
    %239 = vmatpush1.msra.mxu0 %v216
    %240 = vmatprep.subr.mxu0 0.0
    %241 = vmatpush1.msra.mxu0 %v217
    %242 = vmatprep.subr.mxu0 0.0
    %243 = vmatpush1.msra.mxu0 %v218
    %244 = vmatprep.subr.mxu0 0.0
    %245 = vmatpush1.msra.mxu0 %v219
    %246 = vmatprep.subr.mxu0 0.0
    %247 = vmatpush1.msra.mxu0 %v220
    %248 = vmatprep.subr.mxu0 0.0
    %249 = vmatpush1.msra.mxu0 %v221
    %250 = vmatprep.subr.mxu0 0.0
    %251 = vmatpush1.msra.mxu0 %v222
    %252 = vmatprep.subr.mxu0 0.0
    %253 = vmatpush1.msra.mxu0 0.0
    %254 = vmatprep.subr.mxu0 0.0
    %255 = vmatpush1.msra.mxu0 0.0
    %256 = vmatprep.subr.mxu0 0.0
    %257 = vmatpush1.msra.mxu0 0.0
    %258 = vmatprep.subr.mxu0 0.0
    %259 = vmatpush1.msra.mxu0 0.0
    %260 = vmatprep.subr.mxu0 0.0
    %261 = vmatpush1.msra.mxu0 0.0
    %262 = vmatprep.subr.mxu0 0.0
    %263 = vmatpush1.msra.mxu0 0.0
    %264 = vmatprep.subr.mxu0 0.0
    %265 = vmatpush1.msra.mxu0 0.0
    %266 = vmatprep.subr.mxu0 0.0
    %267 = vmatpush1.msra.mxu0 0.0
    %268 = vmatprep.subr.mxu0 0.0
    %269 = vmatpush1.msra.mxu0 0.0
    %270 = vmatprep.subr.mxu0 0.0
    %271 = vmatpush1.msra.mxu0 0.0
    %272 = vmatprep.subr.mxu0 0.0
    %273 = vmatpush1.msra.mxu0 0.0
    %274 = vmatprep.subr.mxu0 0.0
    %275 = vmatpush1.msra.mxu0 0.0
    %276 = vmatprep.subr.mxu0 0.0
    %277 = vmatpush1.msra.mxu0 0.0
    %278 = vmatprep.subr.mxu0 0.0
    %279 = vmatpush1.msra.mxu0 0.0
    %280 = vmatprep.subr.mxu0 0.0
    %281 = vmatpush1.msra.mxu0 0.0
    %282 = vmatprep.subr.mxu0 0.0
    %283 = vmatpush1.msra.mxu0 0.0
    %284 = vmatprep.subr.mxu0 0.0
    %285 = vmatpush1.msra.mxu0 0.0
    %286 = vmatprep.subr.mxu0 0.0
    %287 = vmatpush1.msra.mxu0 0.0
    %288 = vmatprep.subr.mxu0 0.0
    %289 = vmatpush1.msra.mxu0 0.0
    %290 = vmatprep.subr.mxu0 0.0
    %291 = vmatpush1.msra.mxu0 0.0
    %292 = vmatprep.subr.mxu0 0.0
    %293 = vmatpush1.msra.mxu0 0.0
    %294 = vmatprep.subr.mxu0 0.0
    %295 = vmatpush1.msra.mxu0 0.0
    %296 = vmatprep.subr.mxu0 0.0
    %297 = vmatpush1.msra.mxu0 0.0
    %298 = vmatprep.mubr.f32.mxu0 0.0
    %299 = vmatmul.mubr.f32.gmra.mrb[0].mxu0 %v232
    %v300 = vpop.f32.mrb[0].mxu0
    %v301 = vadd.f32 %v228, %v300
    %v302 = vpop.f32.mrb[0].mxu0
    %303 = vdwg.mxu0
    %v304 = vmax.f32 %v301, 0.0
    %v305 = vld [vmem:[%s7] sm:$0xff]
    %v306 = vld [vmem:[%s7 + $0x8] sm:$0xff]
    %v307 = vld [vmem:[%s7 + $0x10] sm:$0xff]
    %v308 = vld [vmem:[%s7 + $0x18] sm:$0xff]
    %v309 = vld [vmem:[%s7 + $0x20] sm:$0xff]
    %v310 = vld [vmem:[%s7 + $0x28] sm:$0xff]
    %v311 = vld [vmem:[%s8] sm:$0x1]
    %v313 = vlaneseq
    %v314 = vshrl.u32 %v313, 7
    %v315 = vsub.s32 0, %v314
    %v316 = vrot.slane %v311, %v315
    %vm318 = vcmask 392192
    %v320 = vsel %vm318, %v304, 0
    %322 = vmatprep.subr.mxu0 0.0
    %323 = vmatpush1.msra.mxu0 %v305
    %324 = vmatprep.subr.mxu0 0.0
    %325 = vmatpush1.msra.mxu0 %v306
    %326 = vmatprep.subr.mxu0 0.0
    %327 = vmatpush1.msra.mxu0 %v307
    %328 = vmatprep.subr.mxu0 0.0
    %329 = vmatpush1.msra.mxu0 %v308
    %330 = vmatprep.subr.mxu0 0.0
    %331 = vmatpush1.msra.mxu0 %v309
    %332 = vmatprep.subr.mxu0 0.0
    %333 = vmatpush1.msra.mxu0 %v310
    %334 = vmatprep.subr.mxu0 0.0
    %335 = vmatpush1.msra.mxu0 0.0
    %336 = vmatprep.subr.mxu0 0.0
    %337 = vmatpush1.msra.mxu0 0.0
    %338 = vmatprep.subr.mxu0 0.0
    %339 = vmatpush1.msra.mxu0 0.0
    %340 = vmatprep.subr.mxu0 0.0
    %341 = vmatpush1.msra.mxu0 0.0
    %342 = vmatprep.subr.mxu0 0.0
    %343 = vmatpush1.msra.mxu0 0.0
    %344 = vmatprep.subr.mxu0 0.0
    %345 = vmatpush1.msra.mxu0 0.0
    %346 = vmatprep.subr.mxu0 0.0
    %347 = vmatpush1.msra.mxu0 0.0
    %348 = vmatprep.subr.mxu0 0.0
    %349 = vmatpush1.msra.mxu0 0.0
    %350 = vmatprep.subr.mxu0 0.0
    %351 = vmatpush1.msra.mxu0 0.0
    %352 = vmatprep.subr.mxu0 0.0
    %353 = vmatpush1.msra.mxu0 0.0
    %354 = vmatprep.subr.mxu0 0.0
    %355 = vmatpush1.msra.mxu0 0.0
    %356 = vmatprep.subr.mxu0 0.0
    %357 = vmatpush1.msra.mxu0 0.0
    %358 = vmatprep.subr.mxu0 0.0
    %359 = vmatpush1.msra.mxu0 0.0
    %360 = vmatprep.subr.mxu0 0.0
    %361 = vmatpush1.msra.mxu0 0.0
    %362 = vmatprep.subr.mxu0 0.0
    %363 = vmatpush1.msra.mxu0 0.0
    %364 = vmatprep.subr.mxu0 0.0
    %365 = vmatpush1.msra.mxu0 0.0
    %366 = vmatprep.subr.mxu0 0.0
    %367 = vmatpush1.msra.mxu0 0.0
    %368 = vmatprep.subr.mxu0 0.0
    %369 = vmatpush1.msra.mxu0 0.0
    %370 = vmatprep.subr.mxu0 0.0
    %371 = vmatpush1.msra.mxu0 0.0
    %372 = vmatprep.subr.mxu0 0.0
    %373 = vmatpush1.msra.mxu0 0.0
    %374 = vmatprep.subr.mxu0 0.0
    %375 = vmatpush1.msra.mxu0 0.0
    %376 = vmatprep.subr.mxu0 0.0
    %377 = vmatpush1.msra.mxu0 0.0
    %378 = vmatprep.subr.mxu0 0.0
    %379 = vmatpush1.msra.mxu0 0.0
    %380 = vmatprep.subr.mxu0 0.0
    %381 = vmatpush1.msra.mxu0 0.0
    %382 = vmatprep.subr.mxu0 0.0
    %383 = vmatpush1.msra.mxu0 0.0
    %384 = vmatprep.subr.mxu0 0.0
    %385 = vmatpush1.msra.mxu0 0.0
    %386 = vmatprep.mubr.f32.mxu0 0.0
    %387 = vmatmul.mubr.f32.gmra.mrb[0].mxu0 %v320
    %v388 = vpop.f32.mrb[0].mxu0
    %v389 = vadd.f32 %v316, %v388
    %v390 = vpop.f32.mrb[0].mxu0
    %391 = vdwg.mxu0
    %392 = vst [vmem:[#allocation2] sm:$0xff] %v389
    // Predicated region
    $region38: #{tpu_custom_call.1} parent=1 // pred_check
      _
    $region39: #{tpu_custom_call.1} parent=1 // pred_check_branch
      %394 = sbr.rel (0) target = $region41
    $region40: #{tpu_custom_call.1} parent=1 // pred_region
      %s396 = ssub.s32 128, 128
      %397 = vsyncadd [#allocation3], %s396
      %s399 = sshll.u32 [#allocation2], 4
      %s400 = int_to_ptr.vmem [resolvable:$true] %s399
      %402 = dma.vmem_to_hbm [thread:$0]  %s400, 128, %s9, [#allocation3]
    $region41: #{tpu_custom_call.1} parent=1 // pred_fallthru
      _
    // Predicated region
    $region42: #{tpu_custom_call.1} parent=1 // pred_check
      _
    $region43: #{tpu_custom_call.1} parent=1 // pred_check_branch
      %404 = sbr.rel (0) target = $region45
    $region44: #{tpu_custom_call.1} parent=1 // pred_region
      %405 = dma.done [#allocation3], 128
    $region45: #{tpu_custom_call.1} parent=1 // pred_fallthru
      _
    %406 = vsyncpa [#allocation3], 1

</llo_original>
